<compile_context>
chip_gen: v5e
topology: v5e:2x2
jax: 0.10.0
libtpu: 0.0.40
codegen_flags: <defaults>
</compile_context>

<pallas_src>
from functools import partial

import jax
import jax.numpy as jnp
from jax.experimental import pallas as pl
from jax.experimental.pallas import tpu as pltpu


def _round_up(x: int, m: int) -> int:
    return ((x + m - 1) // m) * m


def _pad2d(a, rows: int, cols: int):
    """Zero-pad a 2-D array up to (rows, cols); no-op if already that shape."""
    r, c = a.shape
    if r == rows and c == cols:
        return a
    return jnp.pad(a, ((0, rows - r), (0, cols - c)))


# ----------------------------- Pallas kernel --------------------------------
def _mlp_fused_kernel(x_ref, *refs, num_layers: int, compute_dtype):
    """One M-tile of the full MLP: chained (dot + bias [+ relu]) in VMEM."""
    o_ref = refs[-1]
    wb = refs[:-1]                      # (w0, b0, w1, b1, ...)
    h = x_ref[...]
    for i in range(num_layers):
        w = wb[2 * i][...]
        b = wb[2 * i + 1][...]          # (1, N) bias row, broadcasts over M
        y = jnp.dot(h.astype(compute_dtype), w.astype(compute_dtype),
                    preferred_element_type=jnp.float32)
        y = y + b.astype(jnp.float32)
        if i < num_layers - 1:
            y = jnp.maximum(y, 0.0)     # f32 epilogue (safe on v5e too)
        h = y
    o_ref[...] = h.astype(o_ref.dtype)


@partial(jax.jit, static_argnames=("tm", "compute_dtype"))
def mlp_forward(params, x, *, tm: int = 256, compute_dtype=jnp.float32):
    """Fused MLP forward. `params` is a list of (W(in,out), b(1,out))."""
    num_layers = len(params)
    orig_shape = x.shape
    x2d = x.reshape(-1, orig_shape[-1])
    M, K0 = x2d.shape

    # True (unpadded) feature dims per stage and their 128-lane padded versions.
    dims = [K0] + [w.shape[1] for (w, _) in params]
    dims_p = [_round_up(d, 128) for d in dims]

    # M tile: multiple of 8, no bigger than the (8-rounded) batch.
    tm_eff = max(8, min(_round_up(tm, 8), _round_up(M, 8)))
    Mp = _round_up(M, tm_eff)

    # Zero-pad activations and parameters (no-ops when already aligned).
    xp = _pad2d(x2d, Mp, dims_p[0])

    wb_inputs = []
    in_specs = [pl.BlockSpec((tm_eff, dims_p[0]), lambda i: (i, 0))]
    for li, (w, b) in enumerate(params):
        kin_p, kout_p = dims_p[li], dims_p[li + 1]
        wb_inputs.append(_pad2d(w, kin_p, kout_p))
        wb_inputs.append(_pad2d(b.reshape(1, -1), 1, kout_p))
        # Grid-invariant index maps: weights/bias loaded once, stay resident.
        in_specs.append(pl.BlockSpec((kin_p, kout_p), lambda i: (0, 0)))
        in_specs.append(pl.BlockSpec((1, kout_p), lambda i: (0, 0)))

    # Advisory cost estimate (padded shapes).
    out_dtype = x.dtype
    flops = 2 * Mp * sum(dims_p[i] * dims_p[i + 1] for i in range(num_layers))
    bytes_accessed = (
        xp.size * xp.dtype.itemsize
        + sum(a.size * a.dtype.itemsize for a in wb_inputs)
        + Mp * dims_p[-1] * jnp.dtype(out_dtype).itemsize
    )

    # Rough VMEM budget: double-buffered x/out tiles + resident params +
    # intermediate activation tiles.  Ask for headroom only if it exceeds the
    # default scoped limit; cap well under the 64 MiB (v7x) physical floor.
    itemsize = 4
    vmem_est = (
        2 * tm_eff * dims_p[0] * itemsize                     # x tile (dbl-buf)
        + 2 * tm_eff * dims_p[-1] * itemsize                  # out tile (dbl-buf)
        + 2 * sum(a.size * itemsize for a in wb_inputs)       # resident params
        + tm_eff * max(dims_p) * itemsize * 2                 # live activations
    )
    vmem_limit = min(max(vmem_est * 2, 32 * 1024 * 1024), 100 * 1024 * 1024)

    out_p = pl.pallas_call(
        partial(_mlp_fused_kernel, num_layers=num_layers,
                compute_dtype=compute_dtype),
        out_shape=jax.ShapeDtypeStruct((Mp, dims_p[-1]), out_dtype),
        grid=(Mp // tm_eff,),
        in_specs=in_specs,
        out_specs=pl.BlockSpec((tm_eff, dims_p[-1]), lambda i: (i, 0)),
        compiler_params=pltpu.CompilerParams(
            dimension_semantics=("parallel",),   # shard M tiles across TCs (v7x)
            vmem_limit_bytes=int(vmem_limit),
        ),
        cost_estimate=pl.CostEstimate(
            flops=flops, transcendentals=0, bytes_accessed=bytes_accessed),
    )(xp, *wb_inputs)

    out = out_p[:M, :dims[-1]]
    return out.reshape(*orig_shape[:-1], dims[-1])


# ------------------------------ parameters -----------------------------------
def init_mlp_params(key, input_dim, hidden_dim, output_dim, num_layers,
                    dtype=jnp.float32):
    """Deterministic init mirroring nn.Linear's U(-1/sqrt(fan_in), 1/sqrt(fan_in))."""
    h = [hidden_dim] * (num_layers - 1)
    dims_in = [input_dim] + h
    dims_out = h + [output_dim]
    params = []
    for n, k in zip(dims_in, dims_out):
        key, kw, kb = jax.random.split(key, 3)
        bound = 1.0 / (n ** 0.5)
        w = jax.random.uniform(kw, (n, k), dtype, minval=-bound, maxval=bound)
        b = jax.random.uniform(kb, (1, k), dtype, minval=-bound, maxval=bound)
        params.append((w, b))
    return params


def mlp_reference(params, x):
    num_layers = len(params)
    x2d = x.reshape(-1, x.shape[-1])
    for i, (w, b) in enumerate(params):
        x2d = x2d @ w + b
        if i < num_layers - 1:
            x2d = jnp.maximum(x2d, 0.0)
    return x2d.reshape(*x.shape[:-1], params[-1][0].shape[1])


# --------------------------------- main --------------------------------------
if __name__ == "__main__":
    key = jax.random.PRNGKey(0)
    k_params, k_x = jax.random.split(key)

    input_dim, hidden_dim, output_dim, num_layers = 32, 32, 4, 3
    batch = 512  # -> Mp = 512, tm = 256, grid = 2 (both TCs engaged on v7x)

    params = init_mlp_params(k_params, input_dim, hidden_dim, output_dim, num_layers)
    x = jax.random.normal(k_x, (batch, input_dim), dtype=jnp.float32)

    # f32 end-to-end here; on v6e/v7x pass compute_dtype=jnp.bfloat16 for MXU peak.
    out = mlp_forward(params, x, tm=256, compute_dtype=jnp.float32)
    out = jax.block_until_ready(out)

    ref = mlp_reference(params, x)
    assert out.shape == (batch, output_dim)
    assert jnp.allclose(out, ref, atol=1e-5, rtol=1e-5)

    # Also exercise a batch that is NOT a multiple of the tile (padding path).
    x_odd = jax.random.normal(jax.random.PRNGKey(1), (13, input_dim), jnp.float32)
    out_odd = jax.block_until_ready(mlp_forward(params, x_odd, tm=256))
    assert out_odd.shape == (13, output_dim)
    assert jnp.allclose(out_odd, mlp_reference(params, x_odd), atol=1e-5, rtol=1e-5)

    print("KERNEL_OK")
</pallas_src>

<mosaic_0001>
module attributes {stable_mosaic.version = 11 : i64} {
  func.func @_mlp_fused_kernel(%arg0: i32, %arg1: memref<256x128xf32, #tpu.memory_space<vmem>>, %arg2: memref<128x128xf32, #tpu.memory_space<vmem>>, %arg3: memref<1x128xf32, #tpu.memory_space<vmem>>, %arg4: memref<128x128xf32, #tpu.memory_space<vmem>>, %arg5: memref<1x128xf32, #tpu.memory_space<vmem>>, %arg6: memref<128x128xf32, #tpu.memory_space<vmem>>, %arg7: memref<1x128xf32, #tpu.memory_space<vmem>>, %arg8: memref<256x128xf32, #tpu.memory_space<vmem>>) attributes {dimension_semantics = [#tpu.dimension_semantics<parallel>], iteration_bounds = array<i64: 2>, scalar_prefetch = 0 : i64, scratch_operands = 0 : i64, tpu.core_type = #tpu.core_type<tc>, window_params = [{transform_indices = @transform_0, window_bounds = array<i64: 256, 128>}, {pipeline_mode = #tpu.pipeline_mode<synchronous>, transform_indices = @transform_1, window_bounds = array<i64: 128, 128>}, {pipeline_mode = #tpu.pipeline_mode<synchronous>, transform_indices = @transform_2, window_bounds = array<i64: 1, 128>}, {pipeline_mode = #tpu.pipeline_mode<synchronous>, transform_indices = @transform_3, window_bounds = array<i64: 128, 128>}, {pipeline_mode = #tpu.pipeline_mode<synchronous>, transform_indices = @transform_4, window_bounds = array<i64: 1, 128>}, {pipeline_mode = #tpu.pipeline_mode<synchronous>, transform_indices = @transform_5, window_bounds = array<i64: 128, 128>}, {pipeline_mode = #tpu.pipeline_mode<synchronous>, transform_indices = @transform_6, window_bounds = array<i64: 1, 128>}, {transform_indices = @transform_7, window_bounds = array<i64: 256, 128>}]} {
    %c0 = arith.constant 0 : index
    %c0_0 = arith.constant 0 : index
    %0 = vector.load %arg1[%c0, %c0_0] : memref<256x128xf32, #tpu.memory_space<vmem>>, vector<256x128xf32>
    %c0_1 = arith.constant 0 : index
    %c0_2 = arith.constant 0 : index
    %1 = vector.load %arg2[%c0_1, %c0_2] : memref<128x128xf32, #tpu.memory_space<vmem>>, vector<128x128xf32>
    %c0_3 = arith.constant 0 : index
    %c0_4 = arith.constant 0 : index
    %2 = vector.load %arg3[%c0_3, %c0_4] : memref<1x128xf32, #tpu.memory_space<vmem>>, vector<1x128xf32>
    %cst = arith.constant dense<0.000000e+00> : vector<256x128xf32>
    %3 = tpu.matmul %0, %1, %cst {dimension_numbers = #tpu.dot_dimension_numbers<[1], [0], [0], [1], [0, 0, 1, 1], [], []>} : vector<256x128xf32>, vector<128x128xf32>, vector<256x128xf32> -> vector<256x128xf32>
    %4 = vector.broadcast %2 : vector<1x128xf32> to vector<256x128xf32>
    %5 = arith.addf %3, %4 : vector<256x128xf32>
    %cst_5 = arith.constant 0.000000e+00 : f32
    %6 = vector.broadcast %cst_5 : f32 to vector<256x128xf32>
    %7 = arith.maximumf %5, %6 : vector<256x128xf32>
    %c0_6 = arith.constant 0 : index
    %c0_7 = arith.constant 0 : index
    %8 = vector.load %arg4[%c0_6, %c0_7] : memref<128x128xf32, #tpu.memory_space<vmem>>, vector<128x128xf32>
    %c0_8 = arith.constant 0 : index
    %c0_9 = arith.constant 0 : index
    %9 = vector.load %arg5[%c0_8, %c0_9] : memref<1x128xf32, #tpu.memory_space<vmem>>, vector<1x128xf32>
    %cst_10 = arith.constant dense<0.000000e+00> : vector<256x128xf32>
    %10 = tpu.matmul %7, %8, %cst_10 {dimension_numbers = #tpu.dot_dimension_numbers<[1], [0], [0], [1], [0, 0, 1, 1], [], []>} : vector<256x128xf32>, vector<128x128xf32>, vector<256x128xf32> -> vector<256x128xf32>
    %11 = vector.broadcast %9 : vector<1x128xf32> to vector<256x128xf32>
    %12 = arith.addf %10, %11 : vector<256x128xf32>
    %cst_11 = arith.constant 0.000000e+00 : f32
    %13 = vector.broadcast %cst_11 : f32 to vector<256x128xf32>
    %14 = arith.maximumf %12, %13 : vector<256x128xf32>
    %c0_12 = arith.constant 0 : index
    %c0_13 = arith.constant 0 : index
    %15 = vector.load %arg6[%c0_12, %c0_13] : memref<128x128xf32, #tpu.memory_space<vmem>>, vector<128x128xf32>
    %c0_14 = arith.constant 0 : index
    %c0_15 = arith.constant 0 : index
    %16 = vector.load %arg7[%c0_14, %c0_15] : memref<1x128xf32, #tpu.memory_space<vmem>>, vector<1x128xf32>
    %cst_16 = arith.constant dense<0.000000e+00> : vector<256x128xf32>
    %17 = tpu.matmul %14, %15, %cst_16 {dimension_numbers = #tpu.dot_dimension_numbers<[1], [0], [0], [1], [0, 0, 1, 1], [], []>} : vector<256x128xf32>, vector<128x128xf32>, vector<256x128xf32> -> vector<256x128xf32>
    %18 = vector.broadcast %16 : vector<1x128xf32> to vector<256x128xf32>
    %19 = arith.addf %17, %18 : vector<256x128xf32>
    %c0_17 = arith.constant 0 : index
    %c0_18 = arith.constant 0 : index
    %20 = vector.load %arg8[%c0_17, %c0_18] : memref<256x128xf32, #tpu.memory_space<vmem>>, vector<256x128xf32>
    tpu.vector_store %arg8[%c0_17, %c0_18], %19 {strides = array<i32>} : memref<256x128xf32, #tpu.memory_space<vmem>>, vector<256x128xf32>,
    return
  }
  func.func @transform_0(%arg0: i32) -> (i32, i32) {
    %c0_i32 = arith.constant 0 : i32
    %c0_i32_0 = arith.constant 0 : i32
    return %arg0, %c0_i32 : i32, i32
  }
  func.func @transform_1(%arg0: i32) -> (i32, i32) {
    %c0_i32 = arith.constant 0 : i32
    %c0_i32_0 = arith.constant 0 : i32
    %c0_i32_1 = arith.constant 0 : i32
    return %c0_i32, %c0_i32_0 : i32, i32
  }
  func.func @transform_2(%arg0: i32) -> (i32, i32) {
    %c0_i32 = arith.constant 0 : i32
    %c0_i32_0 = arith.constant 0 : i32
    %c0_i32_1 = arith.constant 0 : i32
    return %c0_i32, %c0_i32_0 : i32, i32
  }
  func.func @transform_3(%arg0: i32) -> (i32, i32) {
    %c0_i32 = arith.constant 0 : i32
    %c0_i32_0 = arith.constant 0 : i32
    %c0_i32_1 = arith.constant 0 : i32
    return %c0_i32, %c0_i32_0 : i32, i32
  }
  func.func @transform_4(%arg0: i32) -> (i32, i32) {
    %c0_i32 = arith.constant 0 : i32
    %c0_i32_0 = arith.constant 0 : i32
    %c0_i32_1 = arith.constant 0 : i32
    return %c0_i32, %c0_i32_0 : i32, i32
  }
  func.func @transform_5(%arg0: i32) -> (i32, i32) {
    %c0_i32 = arith.constant 0 : i32
    %c0_i32_0 = arith.constant 0 : i32
    %c0_i32_1 = arith.constant 0 : i32
    return %c0_i32, %c0_i32_0 : i32, i32
  }
  func.func @transform_6(%arg0: i32) -> (i32, i32) {
    %c0_i32 = arith.constant 0 : i32
    %c0_i32_0 = arith.constant 0 : i32
    %c0_i32_1 = arith.constant 0 : i32
    return %c0_i32, %c0_i32_0 : i32, i32
  }
  func.func @transform_7(%arg0: i32) -> (i32, i32) {
    %c0_i32 = arith.constant 0 : i32
    %c0_i32_0 = arith.constant 0 : i32
    return %arg0, %c0_i32 : i32, i32
  }
}

</mosaic_0001>

<llo_original>
// kernel: mlp_forward.1
$region0: #{mlp_forward.1}
  #allocation0 [shape = 'u32[]', space=smem, size = 0x4, offset = 0x4, fixed_abs, tag = 'smem constant byte address 0x4 - core index']
  #allocation1 [shape = 'u32[72,128]{1,0:T(1,128)}', space=vmem, size = 0x9000, scoped, tag = 'internal scratch']
  %s0 = inlined_call_operand.vmem [shape: f32[512,128], index: 0, kind: input, shape index: {}]
  %s1 = inlined_call_operand.vmem [shape: f32[128,128], index: 1, kind: input, shape index: {}]
  %s2 = inlined_call_operand.vmem [shape: f32[1,128], index: 2, kind: input, shape index: {}]
  %s3 = inlined_call_operand.vmem [shape: f32[128,128], index: 3, kind: input, shape index: {}]
  %s4 = inlined_call_operand.vmem [shape: f32[1,128], index: 4, kind: input, shape index: {}]
  %s5 = inlined_call_operand.vmem [shape: f32[128,128], index: 5, kind: input, shape index: {}]
  %s6 = inlined_call_operand.vmem [shape: f32[1,128], index: 6, kind: input, shape index: {}]
  %s7 = inlined_call_operand.vmem [shape: f32[512,128], index: 7, kind: output, shape index: {}]
  %s8 = sld [smem:[#allocation0]]
  $region61: #{mlp_forward.1} parent=0
    _
  %s10 = ssub.s32 1, %s8
  %s11 = scalar_select 0, %s10, %s8
  loop: start=0, step=1, limit=4
  $region2: #{mlp_forward.1} parent=0 // loop_pre_header
    _
  $region3: #{mlp_forward.1} parent=0 // loop_header
    %s13 = sphi 0, %s17
    %p14 = scmp.ge.s32.totalorder %s13, 4
    %s23 = sphi 0, %s25
    %s26 = sphi 0, %s23
    %s27 = sphi 0, %s26
    %s43 = sphi 0, %s27
    %s47 = sphi 0, %s47
    %s49 = sphi 0, %s47
    %s50 = sphi 0, %s49
    %s64 = sphi 0, %s50
    %s68 = sphi 0, %s68
    %s70 = sphi 0, %s68
    %s71 = sphi 0, %s70
    %s85 = sphi 0, %s71
    %s89 = sphi 0, %s89
    %s91 = sphi 0, %s89
    %s92 = sphi 0, %s91
    %s106 = sphi 0, %s92
    %s110 = sphi 0, %s110
    %s112 = sphi 0, %s110
    %s113 = sphi 0, %s112
    %s127 = sphi 0, %s113
    %s131 = sphi 0, %s131
    %s133 = sphi 0, %s131
    %s134 = sphi 0, %s133
    %s148 = sphi 0, %s134
    %s152 = sphi 0, %s152
    %s154 = sphi 0, %s152
    %s155 = sphi 0, %s154
    %s169 = sphi 0, %s155
    %s175 = sphi 0, %s177
    %s178 = sphi 0, %s175
    %s179 = sphi 0, %s178
    %s195 = sphi 0, %s179
  $region4: #{mlp_forward.1} parent=0 // loop_header_branch
    %16 = sbr.rel (%p14) target = $region8
  $region5: #{mlp_forward.1} parent=0 // loop_body
    %s18 = ssub.s32 %s13, 1
    %s19 = ssub.s32 %s13, 2
    %s20 = sadd.s32 %s13, 1
    %s21 = ssub.s32 %s13, %s20
    %p22 = scmp.eq.s32.totalorder %s21, 0
    %s24 = sadd.s32 %s23, 1
    %s25 = scalar_select %p22, %s23, %s24
    %p28 = pneg %p22
    %p29 = scmp.eq.s32.totalorder %s13, 1
    %p30 = por %p28, %p29
    %p31 = scmp.ne.s32.totalorder %s23, %s26
    %p32 = scmp.eq.s32.totalorder %s13, 0
    %p33 = por %p31, %p32
    %p34 = scmp.ne.s32.totalorder %s23, %s26
    %p35 = scmp.eq.s32.totalorder %s18, 1
    %p36 = por %p34, %p35
    %p37 = scmp.ne.s32.totalorder %s26, %s27
    %p38 = scmp.eq.s32.totalorder %s18, 0
    %p39 = por %p37, %p38
    %p40 = scmp.ne.s32.totalorder %s26, %s27
    %p41 = scmp.eq.s32.totalorder %s19, 1
    %p42 = por %p40, %p41
    %p44 = scmp.ne.s32.totalorder %s27, %s43
    %p45 = scmp.eq.s32.totalorder %s19, 0
    %p46 = por %p44, %p45
    %s48 = sadd.s32 %s47, 1
    %p51 = scmp.eq.s32.totalorder %s13, 1
    %p52 = scmp.ne.s32.totalorder %s47, %s49
    %p53 = scmp.eq.s32.totalorder %s13, 0
    %p54 = por %p52, %p53
    %p55 = scmp.ne.s32.totalorder %s47, %s49
    %p56 = scmp.eq.s32.totalorder %s18, 1
    %p57 = por %p55, %p56
    %p58 = scmp.ne.s32.totalorder %s49, %s50
    %p59 = scmp.eq.s32.totalorder %s18, 0
    %p60 = por %p58, %p59
    %p61 = scmp.ne.s32.totalorder %s49, %s50
    %p62 = scmp.eq.s32.totalorder %s19, 1
    %p63 = por %p61, %p62
    %p65 = scmp.ne.s32.totalorder %s50, %s64
    %p66 = scmp.eq.s32.totalorder %s19, 0
    %p67 = por %p65, %p66
    %s69 = sadd.s32 %s68, 1
    %p72 = scmp.eq.s32.totalorder %s13, 1
    %p73 = scmp.ne.s32.totalorder %s68, %s70
    %p74 = scmp.eq.s32.totalorder %s13, 0
    %p75 = por %p73, %p74
    %p76 = scmp.ne.s32.totalorder %s68, %s70
    %p77 = scmp.eq.s32.totalorder %s18, 1
    %p78 = por %p76, %p77
    %p79 = scmp.ne.s32.totalorder %s70, %s71
    %p80 = scmp.eq.s32.totalorder %s18, 0
    %p81 = por %p79, %p80
    %p82 = scmp.ne.s32.totalorder %s70, %s71
    %p83 = scmp.eq.s32.totalorder %s19, 1
    %p84 = por %p82, %p83
    %p86 = scmp.ne.s32.totalorder %s71, %s85
    %p87 = scmp.eq.s32.totalorder %s19, 0
    %p88 = por %p86, %p87
    %s90 = sadd.s32 %s89, 1
    %p93 = scmp.eq.s32.totalorder %s13, 1
    %p94 = scmp.ne.s32.totalorder %s89, %s91
    %p95 = scmp.eq.s32.totalorder %s13, 0
    %p96 = por %p94, %p95
    %p97 = scmp.ne.s32.totalorder %s89, %s91
    %p98 = scmp.eq.s32.totalorder %s18, 1
    %p99 = por %p97, %p98
    %p100 = scmp.ne.s32.totalorder %s91, %s92
    %p101 = scmp.eq.s32.totalorder %s18, 0
    %p102 = por %p100, %p101
    %p103 = scmp.ne.s32.totalorder %s91, %s92
    %p104 = scmp.eq.s32.totalorder %s19, 1
    %p105 = por %p103, %p104
    %p107 = scmp.ne.s32.totalorder %s92, %s106
    %p108 = scmp.eq.s32.totalorder %s19, 0
    %p109 = por %p107, %p108
    %s111 = sadd.s32 %s110, 1
    %p114 = scmp.eq.s32.totalorder %s13, 1
    %p115 = scmp.ne.s32.totalorder %s110, %s112
    %p116 = scmp.eq.s32.totalorder %s13, 0
    %p117 = por %p115, %p116
    %p118 = scmp.ne.s32.totalorder %s110, %s112
    %p119 = scmp.eq.s32.totalorder %s18, 1
    %p120 = por %p118, %p119
    %p121 = scmp.ne.s32.totalorder %s112, %s113
    %p122 = scmp.eq.s32.totalorder %s18, 0
    %p123 = por %p121, %p122
    %p124 = scmp.ne.s32.totalorder %s112, %s113
    %p125 = scmp.eq.s32.totalorder %s19, 1
    %p126 = por %p124, %p125
    %p128 = scmp.ne.s32.totalorder %s113, %s127
    %p129 = scmp.eq.s32.totalorder %s19, 0
    %p130 = por %p128, %p129
    %s132 = sadd.s32 %s131, 1
    %p135 = scmp.eq.s32.totalorder %s13, 1
    %p136 = scmp.ne.s32.totalorder %s131, %s133
    %p137 = scmp.eq.s32.totalorder %s13, 0
    %p138 = por %p136, %p137
    %p139 = scmp.ne.s32.totalorder %s131, %s133
    %p140 = scmp.eq.s32.totalorder %s18, 1
    %p141 = por %p139, %p140
    %p142 = scmp.ne.s32.totalorder %s133, %s134
    %p143 = scmp.eq.s32.totalorder %s18, 0
    %p144 = por %p142, %p143
    %p145 = scmp.ne.s32.totalorder %s133, %s134
    %p146 = scmp.eq.s32.totalorder %s19, 1
    %p147 = por %p145, %p146
    %p149 = scmp.ne.s32.totalorder %s134, %s148
    %p150 = scmp.eq.s32.totalorder %s19, 0
    %p151 = por %p149, %p150
    %s153 = sadd.s32 %s152, 1
    %p156 = scmp.eq.s32.totalorder %s13, 1
    %p157 = scmp.ne.s32.totalorder %s152, %s154
    %p158 = scmp.eq.s32.totalorder %s13, 0
    %p159 = por %p157, %p158
    %p160 = scmp.ne.s32.totalorder %s152, %s154
    %p161 = scmp.eq.s32.totalorder %s18, 1
    %p162 = por %p160, %p161
    %p163 = scmp.ne.s32.totalorder %s154, %s155
    %p164 = scmp.eq.s32.totalorder %s18, 0
    %p165 = por %p163, %p164
    %p166 = scmp.ne.s32.totalorder %s154, %s155
    %p167 = scmp.eq.s32.totalorder %s19, 1
    %p168 = por %p166, %p167
    %p170 = scmp.ne.s32.totalorder %s155, %s169
    %p171 = scmp.eq.s32.totalorder %s19, 0
    %p172 = por %p170, %p171
    %s173 = ssub.s32 %s13, %s20
    %p174 = scmp.eq.s32.totalorder %s173, 0
    %s176 = sadd.s32 %s175, 1
    %s177 = scalar_select %p174, %s175, %s176
    %p180 = pneg %p174
    %p181 = scmp.eq.s32.totalorder %s13, 1
    %p182 = por %p180, %p181
    %p183 = scmp.ne.s32.totalorder %s175, %s178
    %p184 = scmp.eq.s32.totalorder %s13, 0
    %p185 = por %p183, %p184
    %p186 = scmp.ne.s32.totalorder %s175, %s178
    %p187 = scmp.eq.s32.totalorder %s18, 1
    %p188 = por %p186, %p187
    %p189 = scmp.ne.s32.totalorder %s178, %s179
    %p190 = scmp.eq.s32.totalorder %s18, 0
    %p191 = por %p189, %p190
    %p192 = scmp.ne.s32.totalorder %s178, %s179
    %p193 = scmp.eq.s32.totalorder %s19, 1
    %p194 = por %p192, %p193
    %p196 = scmp.ne.s32.totalorder %s179, %s195
    %p197 = scmp.eq.s32.totalorder %s19, 0
    %p198 = por %p196, %p197
    %p199 = scmp.le.s32.totalorder 1, %s13
    %p200 = scmp.lt.s32.totalorder %s13, 3
    %p201 = pnand %p199, %p200
    %p202 = pneg %p201
    // Predicated region
    $region9: #{mlp_forward.1} parent=5 // pred_check
      _
    $region10: #{mlp_forward.1} parent=5 // pred_check_branch
      %204 = sbr.rel (%p201) target = $region12
    $region11: #{mlp_forward.1} parent=5 // pred_region
      %s205 = ssub.s32 %s13, 1
      // Predicated region
      $region13: #{mlp_forward.1} parent=11 // pred_check
        %p206 = pneg %p60
      $region14: #{mlp_forward.1} parent=11 // pred_check_branch
        %208 = sbr.rel (%p206) target = $region16
      $region15: #{mlp_forward.1} parent=11 // pred_region
        _
      $region16: #{mlp_forward.1} parent=11 // pred_fallthru
        _
      // Predicated region
      $region17: #{mlp_forward.1} parent=11 // pred_check
        %p209 = pneg %p81
      $region18: #{mlp_forward.1} parent=11 // pred_check_branch
        %211 = sbr.rel (%p209) target = $region20
      $region19: #{mlp_forward.1} parent=11 // pred_region
        _
      $region20: #{mlp_forward.1} parent=11 // pred_fallthru
        _
      // Predicated region
      $region21: #{mlp_forward.1} parent=11 // pred_check
        %p212 = pneg %p102
      $region22: #{mlp_forward.1} parent=11 // pred_check_branch
        %214 = sbr.rel (%p212) target = $region24
      $region23: #{mlp_forward.1} parent=11 // pred_region
        _
      $region24: #{mlp_forward.1} parent=11 // pred_fallthru
        _
      // Predicated region
      $region25: #{mlp_forward.1} parent=11 // pred_check
        %p215 = pneg %p123
      $region26: #{mlp_forward.1} parent=11 // pred_check_branch
        %217 = sbr.rel (%p215) target = $region28
      $region27: #{mlp_forward.1} parent=11 // pred_region
        _
      $region28: #{mlp_forward.1} parent=11 // pred_fallthru
        _
      // Predicated region
      $region29: #{mlp_forward.1} parent=11 // pred_check
        %p218 = pneg %p144
      $region30: #{mlp_forward.1} parent=11 // pred_check_branch
        %220 = sbr.rel (%p218) target = $region32
      $region31: #{mlp_forward.1} parent=11 // pred_region
        _
      $region32: #{mlp_forward.1} parent=11 // pred_fallthru
        _
      // Predicated region
      $region33: #{mlp_forward.1} parent=11 // pred_check
        %p221 = pneg %p165
      $region34: #{mlp_forward.1} parent=11 // pred_check_branch
        %223 = sbr.rel (%p221) target = $region36
      $region35: #{mlp_forward.1} parent=11 // pred_region
        _
      $region36: #{mlp_forward.1} parent=11 // pred_fallthru
        _
    $region12: #{mlp_forward.1} parent=5 // pred_fallthru
      _
    %p224 = scmp.lt.s32.totalorder %s13, 2
    // Predicated region
    $region37: #{mlp_forward.1} parent=5 // pred_check
      %p225 = pneg %p224
    $region38: #{mlp_forward.1} parent=5 // pred_check_branch
      %227 = sbr.rel (%p225) target = $region40
    $region39: #{mlp_forward.1} parent=5 // pred_region
      // Predicated region
      $region41: #{mlp_forward.1} parent=39 // pred_check
        %p228 = pneg %p33
      $region42: #{mlp_forward.1} parent=39 // pred_check_branch
        %230 = sbr.rel (%p228) target = $region44
      $region43: #{mlp_forward.1} parent=39 // pred_region
        %s231 = smul.u32 32, %s13
        %p232 = scmp.lt.s32.totalorder %s231, 63
        %s233 = scalar_select %p232, %s231, 63
        %s234 = smul.addr %s233, 8
        %s235 = scalar_lea.vmem %s0, %s234
        %s236 = smul.u32 32, %s13
      $region44: #{mlp_forward.1} parent=39 // pred_fallthru
        _
    $region40: #{mlp_forward.1} parent=5 // pred_fallthru
      _
    %p237 = scmp.le.s32.totalorder 1, %s13
    %p238 = scmp.lt.s32.totalorder %s13, 3
    %p239 = pnand %p237, %p238
    %p240 = pneg %p239
    // Predicated region
    $region45: #{mlp_forward.1} parent=5 // pred_check
      _
    $region46: #{mlp_forward.1} parent=5 // pred_check_branch
      %242 = sbr.rel (%p239) target = $region48
    $region47: #{mlp_forward.1} parent=5 // pred_region
      %s243 = ssub.s32 %s13, 1
      %s244 = smul.u32 32, %s18
      %p245 = scmp.lt.s32.totalorder %s244, 63
      %s246 = scalar_select %p245, %s244, 63
      %s247 = smul.addr %s246, 8
      %s248 = scalar_lea.vmem %s0, %s247
      %p249 = pneg %p39
      %p250 = pneg %p36
      %p251 = pneg %p60
      %p252 = pneg %p57
      %p253 = pneg %p81
      %p254 = pneg %p78
      %p255 = pneg %p102
      %p256 = pneg %p99
      %p257 = pneg %p123
      %p258 = pneg %p120
      %p259 = pneg %p144
      %p260 = pneg %p141
      %p261 = pneg %p165
      %p262 = pneg %p162
      %p263 = pneg %p191
      %p264 = pneg %p188
      %s265 = smul.u32 32, %s18
      %p266 = scmp.lt.s32.totalorder %s265, 63
      %s267 = scalar_select %p266, %s265, 63
      %s268 = smul.addr %s267, 8
      %s269 = scalar_lea.vmem %s7, %s268
      %s270 = smul.u32 32, %s18
      %p271 = scmp.lt.s32.totalorder %s270, 63
      %s272 = scalar_select %p271, %s270, 63
      %s273 = smul.addr %s272, 8
      %s274 = scalar_lea.vmem %s0, %s273
      %s275 = smul.u32 32, %s18
      %s276 = smul.u32 32, %s18
      %p277 = scmp.lt.s32.totalorder %s276, 63
      %s278 = scalar_select %p277, %s276, 63
      %s279 = smul.addr %s278, 8
      %s280 = scalar_lea.vmem %s7, %s279
      %s281 = smul.u32 32, %s18
      %v282 = vld [vmem:[%s274] sm:$0xff]
      %v283 = vld [vmem:[%s274 + $0x8] sm:$0xff]
      %v284 = vld [vmem:[%s274 + $0x10] sm:$0xff]
      %v285 = vld [vmem:[%s274 + $0x18] sm:$0xff]
      %v286 = vld [vmem:[%s274 + $0x20] sm:$0xff]
      %v287 = vld [vmem:[%s274 + $0x28] sm:$0xff]
      %v288 = vld [vmem:[%s274 + $0x30] sm:$0xff]
      %v289 = vld [vmem:[%s274 + $0x38] sm:$0xff]
      %v290 = vld [vmem:[%s274 + $0x40] sm:$0xff]
      %v291 = vld [vmem:[%s274 + $0x48] sm:$0xff]
      %v292 = vld [vmem:[%s274 + $0x50] sm:$0xff]
      %v293 = vld [vmem:[%s274 + $0x58] sm:$0xff]
      %v294 = vld [vmem:[%s274 + $0x60] sm:$0xff]
      %v295 = vld [vmem:[%s274 + $0x68] sm:$0xff]
      %v296 = vld [vmem:[%s274 + $0x70] sm:$0xff]
      %v297 = vld [vmem:[%s274 + $0x78] sm:$0xff]
      %v298 = vld [vmem:[%s274 + $0x80] sm:$0xff]
      %v299 = vld [vmem:[%s274 + $0x88] sm:$0xff]
      %v300 = vld [vmem:[%s274 + $0x90] sm:$0xff]
      %v301 = vld [vmem:[%s274 + $0x98] sm:$0xff]
      %v302 = vld [vmem:[%s274 + $0xa0] sm:$0xff]
      %v303 = vld [vmem:[%s274 + $0xa8] sm:$0xff]
      %v304 = vld [vmem:[%s274 + $0xb0] sm:$0xff]
      %v305 = vld [vmem:[%s274 + $0xb8] sm:$0xff]
      %v306 = vld [vmem:[%s274 + $0xc0] sm:$0xff]
      %v307 = vld [vmem:[%s274 + $0xc8] sm:$0xff]
      %v308 = vld [vmem:[%s274 + $0xd0] sm:$0xff]
      %v309 = vld [vmem:[%s274 + $0xd8] sm:$0xff]
      %v310 = vld [vmem:[%s274 + $0xe0] sm:$0xff]
      %v311 = vld [vmem:[%s274 + $0xe8] sm:$0xff]
      %v312 = vld [vmem:[%s274 + $0xf0] sm:$0xff]
      %v313 = vld [vmem:[%s274 + $0xf8] sm:$0xff]
      %v314 = vld [vmem:[%s1] sm:$0xff]
      %v315 = vld [vmem:[%s1 + $0x8] sm:$0xff]
      %v316 = vld [vmem:[%s1 + $0x10] sm:$0xff]
      %v317 = vld [vmem:[%s1 + $0x18] sm:$0xff]
      %v318 = vld [vmem:[%s1 + $0x20] sm:$0xff]
      %v319 = vld [vmem:[%s1 + $0x28] sm:$0xff]
      %v320 = vld [vmem:[%s1 + $0x30] sm:$0xff]
      %v321 = vld [vmem:[%s1 + $0x38] sm:$0xff]
      %v322 = vld [vmem:[%s1 + $0x40] sm:$0xff]
      %v323 = vld [vmem:[%s1 + $0x48] sm:$0xff]
      %v324 = vld [vmem:[%s1 + $0x50] sm:$0xff]
      %v325 = vld [vmem:[%s1 + $0x58] sm:$0xff]
      %v326 = vld [vmem:[%s1 + $0x60] sm:$0xff]
      %v327 = vld [vmem:[%s1 + $0x68] sm:$0xff]
      %v328 = vld [vmem:[%s1 + $0x70] sm:$0xff]
      %v329 = vld [vmem:[%s1 + $0x78] sm:$0xff]
      %v330 = vld [vmem:[%s2] sm:$0x1]
      %v332 = vperm.slane %v330, 0
      %334 = vmatpush.msra.mxu0 %v329
      %335 = vmatpush.msra.mxu0 %v328
      %336 = vmatpush.msra.mxu0 %v327
      %337 = vmatpush.msra.mxu0 %v326
      %338 = vmatpush.msra.mxu0 %v325
      %339 = vmatpush.msra.mxu0 %v324
      %340 = vmatpush.msra.mxu0 %v323
      %341 = vmatpush.msra.mxu0 %v322
      %342 = vmatpush.msra.mxu0 %v321
      %343 = vmatpush.msra.mxu0 %v320
      %344 = vmatpush.msra.mxu0 %v319
      %345 = vmatpush.msra.mxu0 %v318
      %346 = vmatpush.msra.mxu0 %v317
      %347 = vmatpush.msra.mxu0 %v316
      %348 = vmatpush.msra.mxu0 %v315
      %349 = vmatpush.msra.mxu0 %v314
      %350 = vmatmul.f32.gmra.mxu0 %v282
      %v351 = vpop.f32.mrf.mxu0
      %v352 = vadd.f32 %v332, %v351
      %353 = vmatmul.f32.gmra.mxu0 %v283
      %v354 = vpop.f32.mrf.mxu0
      %v355 = vadd.f32 %v332, %v354
      %356 = vmatmul.f32.gmra.mxu0 %v284
      %v357 = vpop.f32.mrf.mxu0
      %v358 = vadd.f32 %v332, %v357
      %359 = vmatmul.f32.gmra.mxu0 %v285
      %v360 = vpop.f32.mrf.mxu0
      %v361 = vadd.f32 %v332, %v360
      %362 = vmatmul.f32.gmra.mxu0 %v286
      %v363 = vpop.f32.mrf.mxu0
      %v364 = vadd.f32 %v332, %v363
      %365 = vmatmul.f32.gmra.mxu0 %v287
      %v366 = vpop.f32.mrf.mxu0
      %v367 = vadd.f32 %v332, %v366
      %368 = vmatmul.f32.gmra.mxu0 %v288
      %v369 = vpop.f32.mrf.mxu0
      %v370 = vadd.f32 %v332, %v369
      %371 = vmatmul.f32.gmra.mxu0 %v289
      %v372 = vpop.f32.mrf.mxu0
      %v373 = vadd.f32 %v332, %v372
      %374 = vmatmul.f32.gmra.mxu0 %v290
      %v375 = vpop.f32.mrf.mxu0
      %v376 = vadd.f32 %v332, %v375
      %377 = vmatmul.f32.gmra.mxu0 %v291
      %v378 = vpop.f32.mrf.mxu0
      %v379 = vadd.f32 %v332, %v378
      %380 = vmatmul.f32.gmra.mxu0 %v292
      %v381 = vpop.f32.mrf.mxu0
      %v382 = vadd.f32 %v332, %v381
      %383 = vmatmul.f32.gmra.mxu0 %v293
      %v384 = vpop.f32.mrf.mxu0
      %v385 = vadd.f32 %v332, %v384
      %386 = vmatmul.f32.gmra.mxu0 %v294
      %v387 = vpop.f32.mrf.mxu0
      %v388 = vadd.f32 %v332, %v387
      %389 = vmatmul.f32.gmra.mxu0 %v295
      %v390 = vpop.f32.mrf.mxu0
      %v391 = vadd.f32 %v332, %v390
      %392 = vmatmul.f32.gmra.mxu0 %v296
      %v393 = vpop.f32.mrf.mxu0
      %v394 = vadd.f32 %v332, %v393
      %395 = vmatmul.f32.gmra.mxu0 %v297
      %v396 = vpop.f32.mrf.mxu0
      %v397 = vadd.f32 %v332, %v396
      %398 = vmatmul.f32.gmra.mxu0 %v298
      %v399 = vpop.f32.mrf.mxu0
      %v400 = vadd.f32 %v332, %v399
      %401 = vmatmul.f32.gmra.mxu0 %v299
      %v402 = vpop.f32.mrf.mxu0
      %v403 = vadd.f32 %v332, %v402
      %404 = vmatmul.f32.gmra.mxu0 %v300
      %v405 = vpop.f32.mrf.mxu0
      %v406 = vadd.f32 %v332, %v405
      %407 = vmatmul.f32.gmra.mxu0 %v301
      %v408 = vpop.f32.mrf.mxu0
      %v409 = vadd.f32 %v332, %v408
      %410 = vmatmul.f32.gmra.mxu0 %v302
      %v411 = vpop.f32.mrf.mxu0
      %v412 = vadd.f32 %v332, %v411
      %413 = vmatmul.f32.gmra.mxu0 %v303
      %v414 = vpop.f32.mrf.mxu0
      %v415 = vadd.f32 %v332, %v414
      %416 = vmatmul.f32.gmra.mxu0 %v304
      %v417 = vpop.f32.mrf.mxu0
      %v418 = vadd.f32 %v332, %v417
      %419 = vmatmul.f32.gmra.mxu0 %v305
      %v420 = vpop.f32.mrf.mxu0
      %v421 = vadd.f32 %v332, %v420
      %422 = vmatmul.f32.gmra.mxu0 %v306
      %v423 = vpop.f32.mrf.mxu0
      %v424 = vadd.f32 %v332, %v423
      %425 = vmatmul.f32.gmra.mxu0 %v307
      %v426 = vpop.f32.mrf.mxu0
      %v427 = vadd.f32 %v332, %v426
      %428 = vmatmul.f32.gmra.mxu0 %v308
      %v429 = vpop.f32.mrf.mxu0
      %v430 = vadd.f32 %v332, %v429
      %431 = vmatmul.f32.gmra.mxu0 %v309
      %v432 = vpop.f32.mrf.mxu0
      %v433 = vadd.f32 %v332, %v432
      %434 = vmatmul.f32.gmra.mxu0 %v310
      %v435 = vpop.f32.mrf.mxu0
      %v436 = vadd.f32 %v332, %v435
      %437 = vmatmul.f32.gmra.mxu0 %v311
      %v438 = vpop.f32.mrf.mxu0
      %v439 = vadd.f32 %v332, %v438
      %440 = vmatmul.f32.gmra.mxu0 %v312
      %v441 = vpop.f32.mrf.mxu0
      %v442 = vadd.f32 %v332, %v441
      %443 = vmatmul.f32.gmra.mxu0 %v313
      %v444 = vpop.f32.mrf.mxu0
      %v445 = vadd.f32 %v332, %v444
      %446 = vdwg.mxu0
      %v447 = vmax.f32 %v352, 0.0
      %v448 = vmax.f32 %v355, 0.0
      %v449 = vmax.f32 %v358, 0.0
      %v450 = vmax.f32 %v361, 0.0
      %v451 = vmax.f32 %v364, 0.0
      %v452 = vmax.f32 %v367, 0.0
      %v453 = vmax.f32 %v370, 0.0
      %v454 = vmax.f32 %v373, 0.0
      %v455 = vmax.f32 %v376, 0.0
      %v456 = vmax.f32 %v379, 0.0
      %v457 = vmax.f32 %v382, 0.0
      %v458 = vmax.f32 %v385, 0.0
      %v459 = vmax.f32 %v388, 0.0
      %v460 = vmax.f32 %v391, 0.0
      %v461 = vmax.f32 %v394, 0.0
      %v462 = vmax.f32 %v397, 0.0
      %v463 = vmax.f32 %v400, 0.0
      %v464 = vmax.f32 %v403, 0.0
      %v465 = vmax.f32 %v406, 0.0
      %v466 = vmax.f32 %v409, 0.0
      %v467 = vmax.f32 %v412, 0.0
      %v468 = vmax.f32 %v415, 0.0
      %v469 = vmax.f32 %v418, 0.0
      %v470 = vmax.f32 %v421, 0.0
      %v471 = vmax.f32 %v424, 0.0
      %v472 = vmax.f32 %v427, 0.0
      %v473 = vmax.f32 %v430, 0.0
      %v474 = vmax.f32 %v433, 0.0
      %v475 = vmax.f32 %v436, 0.0
      %v476 = vmax.f32 %v439, 0.0
      %v477 = vmax.f32 %v442, 0.0
      %v478 = vmax.f32 %v445, 0.0
      %v479 = vld [vmem:[%s3] sm:$0xff]
      %v480 = vld [vmem:[%s3 + $0x8] sm:$0xff]
      %v481 = vld [vmem:[%s3 + $0x10] sm:$0xff]
      %v482 = vld [vmem:[%s3 + $0x18] sm:$0xff]
      %v483 = vld [vmem:[%s3 + $0x20] sm:$0xff]
      %v484 = vld [vmem:[%s3 + $0x28] sm:$0xff]
      %v485 = vld [vmem:[%s3 + $0x30] sm:$0xff]
      %v486 = vld [vmem:[%s3 + $0x38] sm:$0xff]
      %v487 = vld [vmem:[%s3 + $0x40] sm:$0xff]
      %v488 = vld [vmem:[%s3 + $0x48] sm:$0xff]
      %v489 = vld [vmem:[%s3 + $0x50] sm:$0xff]
      %v490 = vld [vmem:[%s3 + $0x58] sm:$0xff]
      %v491 = vld [vmem:[%s3 + $0x60] sm:$0xff]
      %v492 = vld [vmem:[%s3 + $0x68] sm:$0xff]
      %v493 = vld [vmem:[%s3 + $0x70] sm:$0xff]
      %v494 = vld [vmem:[%s3 + $0x78] sm:$0xff]
      %v495 = vld [vmem:[%s4] sm:$0x1]
      %v497 = vperm.slane %v495, 0
      %499 = vmatpush.msra.mxu0 %v494
      %500 = vmatpush.msra.mxu0 %v493
      %501 = vmatpush.msra.mxu0 %v492
      %502 = vmatpush.msra.mxu0 %v491
      %503 = vmatpush.msra.mxu0 %v490
      %504 = vmatpush.msra.mxu0 %v489
      %505 = vmatpush.msra.mxu0 %v488
      %506 = vmatpush.msra.mxu0 %v487
      %507 = vmatpush.msra.mxu0 %v486
      %508 = vmatpush.msra.mxu0 %v485
      %509 = vmatpush.msra.mxu0 %v484
      %510 = vmatpush.msra.mxu0 %v483
      %511 = vmatpush.msra.mxu0 %v482
      %512 = vmatpush.msra.mxu0 %v481
      %513 = vmatpush.msra.mxu0 %v480
      %514 = vmatpush.msra.mxu0 %v479
      %515 = vmatmul.f32.gmra.mxu0 %v447
      %v516 = vpop.f32.mrf.mxu0
      %v517 = vadd.f32 %v497, %v516
      %518 = vmatmul.f32.gmra.mxu0 %v448
      %v519 = vpop.f32.mrf.mxu0
      %v520 = vadd.f32 %v497, %v519
      %521 = vmatmul.f32.gmra.mxu0 %v449
      %v522 = vpop.f32.mrf.mxu0
      %v523 = vadd.f32 %v497, %v522
      %524 = vmatmul.f32.gmra.mxu0 %v450
      %v525 = vpop.f32.mrf.mxu0
      %v526 = vadd.f32 %v497, %v525
      %527 = vmatmul.f32.gmra.mxu0 %v451
      %v528 = vpop.f32.mrf.mxu0
      %v529 = vadd.f32 %v497, %v528
      %530 = vmatmul.f32.gmra.mxu0 %v452
      %v531 = vpop.f32.mrf.mxu0
      %v532 = vadd.f32 %v497, %v531
      %533 = vmatmul.f32.gmra.mxu0 %v453
      %v534 = vpop.f32.mrf.mxu0
      %v535 = vadd.f32 %v497, %v534
      %536 = vmatmul.f32.gmra.mxu0 %v454
      %v537 = vpop.f32.mrf.mxu0
      %v538 = vadd.f32 %v497, %v537
      %539 = vmatmul.f32.gmra.mxu0 %v455
      %v540 = vpop.f32.mrf.mxu0
      %v541 = vadd.f32 %v497, %v540
      %542 = vmatmul.f32.gmra.mxu0 %v456
      %v543 = vpop.f32.mrf.mxu0
      %v544 = vadd.f32 %v497, %v543
      %545 = vmatmul.f32.gmra.mxu0 %v457
      %v546 = vpop.f32.mrf.mxu0
      %v547 = vadd.f32 %v497, %v546
      %548 = vmatmul.f32.gmra.mxu0 %v458
      %v549 = vpop.f32.mrf.mxu0
      %v550 = vadd.f32 %v497, %v549
      %551 = vmatmul.f32.gmra.mxu0 %v459
      %v552 = vpop.f32.mrf.mxu0
      %v553 = vadd.f32 %v497, %v552
      %554 = vmatmul.f32.gmra.mxu0 %v460
      %v555 = vpop.f32.mrf.mxu0
      %v556 = vadd.f32 %v497, %v555
      %557 = vmatmul.f32.gmra.mxu0 %v461
      %v558 = vpop.f32.mrf.mxu0
      %v559 = vadd.f32 %v497, %v558
      %560 = vmatmul.f32.gmra.mxu0 %v462
      %v561 = vpop.f32.mrf.mxu0
      %v562 = vadd.f32 %v497, %v561
      %563 = vmatmul.f32.gmra.mxu0 %v463
      %v564 = vpop.f32.mrf.mxu0
      %v565 = vadd.f32 %v497, %v564
      %566 = vmatmul.f32.gmra.mxu0 %v464
      %v567 = vpop.f32.mrf.mxu0
      %v568 = vadd.f32 %v497, %v567
      %569 = vmatmul.f32.gmra.mxu0 %v465
      %v570 = vpop.f32.mrf.mxu0
      %v571 = vadd.f32 %v497, %v570
      %572 = vmatmul.f32.gmra.mxu0 %v466
      %v573 = vpop.f32.mrf.mxu0
      %v574 = vadd.f32 %v497, %v573
      %575 = vmatmul.f32.gmra.mxu0 %v467
      %v576 = vpop.f32.mrf.mxu0
      %v577 = vadd.f32 %v497, %v576
      %578 = vmatmul.f32.gmra.mxu0 %v468
      %v579 = vpop.f32.mrf.mxu0
      %v580 = vadd.f32 %v497, %v579
      %581 = vmatmul.f32.gmra.mxu0 %v469
      %v582 = vpop.f32.mrf.mxu0
      %v583 = vadd.f32 %v497, %v582
      %584 = vmatmul.f32.gmra.mxu0 %v470
      %v585 = vpop.f32.mrf.mxu0
      %v586 = vadd.f32 %v497, %v585
      %587 = vmatmul.f32.gmra.mxu0 %v471
      %v588 = vpop.f32.mrf.mxu0
      %v589 = vadd.f32 %v497, %v588
      %590 = vmatmul.f32.gmra.mxu0 %v472
      %v591 = vpop.f32.mrf.mxu0
      %v592 = vadd.f32 %v497, %v591
      %593 = vmatmul.f32.gmra.mxu0 %v473
      %v594 = vpop.f32.mrf.mxu0
      %v595 = vadd.f32 %v497, %v594
      %596 = vmatmul.f32.gmra.mxu0 %v474
      %v597 = vpop.f32.mrf.mxu0
      %v598 = vadd.f32 %v497, %v597
      %599 = vmatmul.f32.gmra.mxu0 %v475
      %v600 = vpop.f32.mrf.mxu0
      %v601 = vadd.f32 %v497, %v600
      %602 = vmatmul.f32.gmra.mxu0 %v476
      %v603 = vpop.f32.mrf.mxu0
      %v604 = vadd.f32 %v497, %v603
      %605 = vmatmul.f32.gmra.mxu0 %v477
      %v606 = vpop.f32.mrf.mxu0
      %v607 = vadd.f32 %v497, %v606
      %608 = vmatmul.f32.gmra.mxu0 %v478
      %v609 = vpop.f32.mrf.mxu0
      %v610 = vadd.f32 %v497, %v609
      %611 = vdwg.mxu0
      %v612 = vmax.f32 %v517, 0.0
      %v613 = vmax.f32 %v520, 0.0
      %v614 = vmax.f32 %v523, 0.0
      %v615 = vmax.f32 %v526, 0.0
      %v616 = vmax.f32 %v529, 0.0
      %v617 = vmax.f32 %v532, 0.0
      %v618 = vmax.f32 %v535, 0.0
      %v619 = vmax.f32 %v538, 0.0
      %v620 = vmax.f32 %v541, 0.0
      %v621 = vmax.f32 %v544, 0.0
      %v622 = vmax.f32 %v547, 0.0
      %v623 = vmax.f32 %v550, 0.0
      %v624 = vmax.f32 %v553, 0.0
      %v625 = vmax.f32 %v556, 0.0
      %v626 = vmax.f32 %v559, 0.0
      %v627 = vmax.f32 %v562, 0.0
      %v628 = vmax.f32 %v565, 0.0
      %v629 = vmax.f32 %v568, 0.0
      %v630 = vmax.f32 %v571, 0.0
      %v631 = vmax.f32 %v574, 0.0
      %v632 = vmax.f32 %v577, 0.0
      %v633 = vmax.f32 %v580, 0.0
      %v634 = vmax.f32 %v583, 0.0
      %v635 = vmax.f32 %v586, 0.0
      %v636 = vmax.f32 %v589, 0.0
      %v637 = vmax.f32 %v592, 0.0
      %v638 = vmax.f32 %v595, 0.0
      %v639 = vmax.f32 %v598, 0.0
      %v640 = vmax.f32 %v601, 0.0
      %v641 = vmax.f32 %v604, 0.0
      %v642 = vmax.f32 %v607, 0.0
      %v643 = vmax.f32 %v610, 0.0
      %v644 = vld [vmem:[%s5] sm:$0xff]
      %v645 = vld [vmem:[%s5 + $0x8] sm:$0xff]
      %v646 = vld [vmem:[%s5 + $0x10] sm:$0xff]
      %v647 = vld [vmem:[%s5 + $0x18] sm:$0xff]
      %v648 = vld [vmem:[%s5 + $0x20] sm:$0xff]
      %v649 = vld [vmem:[%s5 + $0x28] sm:$0xff]
      %v650 = vld [vmem:[%s5 + $0x30] sm:$0xff]
      %v651 = vld [vmem:[%s5 + $0x38] sm:$0xff]
      %v652 = vld [vmem:[%s5 + $0x40] sm:$0xff]
      %v653 = vld [vmem:[%s5 + $0x48] sm:$0xff]
      %v654 = vld [vmem:[%s5 + $0x50] sm:$0xff]
      %v655 = vld [vmem:[%s5 + $0x58] sm:$0xff]
      %v656 = vld [vmem:[%s5 + $0x60] sm:$0xff]
      %v657 = vld [vmem:[%s5 + $0x68] sm:$0xff]
      %v658 = vld [vmem:[%s5 + $0x70] sm:$0xff]
      %v659 = vld [vmem:[%s5 + $0x78] sm:$0xff]
      %v660 = vld [vmem:[%s6] sm:$0x1]
      %v662 = vperm.slane %v660, 0
      %664 = vmatpush.msra.mxu0 %v659
      %665 = vmatpush.msra.mxu0 %v658
      %666 = vmatpush.msra.mxu0 %v657
      %667 = vmatpush.msra.mxu0 %v656
      %668 = vmatpush.msra.mxu0 %v655
      %669 = vmatpush.msra.mxu0 %v654
      %670 = vmatpush.msra.mxu0 %v653
      %671 = vmatpush.msra.mxu0 %v652
      %672 = vmatpush.msra.mxu0 %v651
      %673 = vmatpush.msra.mxu0 %v650
      %674 = vmatpush.msra.mxu0 %v649
      %675 = vmatpush.msra.mxu0 %v648
      %676 = vmatpush.msra.mxu0 %v647
      %677 = vmatpush.msra.mxu0 %v646
      %678 = vmatpush.msra.mxu0 %v645
      %679 = vmatpush.msra.mxu0 %v644
      %680 = vmatmul.f32.gmra.mxu0 %v612
      %v681 = vpop.f32.mrf.mxu0
      %v682 = vadd.f32 %v662, %v681
      %683 = vmatmul.f32.gmra.mxu0 %v613
      %v684 = vpop.f32.mrf.mxu0
      %v685 = vadd.f32 %v662, %v684
      %686 = vmatmul.f32.gmra.mxu0 %v614
      %v687 = vpop.f32.mrf.mxu0
      %v688 = vadd.f32 %v662, %v687
      %689 = vmatmul.f32.gmra.mxu0 %v615
      %v690 = vpop.f32.mrf.mxu0
      %v691 = vadd.f32 %v662, %v690
      %692 = vmatmul.f32.gmra.mxu0 %v616
      %v693 = vpop.f32.mrf.mxu0
      %v694 = vadd.f32 %v662, %v693
      %695 = vmatmul.f32.gmra.mxu0 %v617
      %v696 = vpop.f32.mrf.mxu0
      %v697 = vadd.f32 %v662, %v696
      %698 = vmatmul.f32.gmra.mxu0 %v618
      %v699 = vpop.f32.mrf.mxu0
      %v700 = vadd.f32 %v662, %v699
      %701 = vmatmul.f32.gmra.mxu0 %v619
      %v702 = vpop.f32.mrf.mxu0
      %v703 = vadd.f32 %v662, %v702
      %704 = vmatmul.f32.gmra.mxu0 %v620
      %v705 = vpop.f32.mrf.mxu0
      %v706 = vadd.f32 %v662, %v705
      %707 = vmatmul.f32.gmra.mxu0 %v621
      %v708 = vpop.f32.mrf.mxu0
      %v709 = vadd.f32 %v662, %v708
      %710 = vmatmul.f32.gmra.mxu0 %v622
      %v711 = vpop.f32.mrf.mxu0
      %v712 = vadd.f32 %v662, %v711
      %713 = vmatmul.f32.gmra.mxu0 %v623
      %v714 = vpop.f32.mrf.mxu0
      %v715 = vadd.f32 %v662, %v714
      %716 = vmatmul.f32.gmra.mxu0 %v624
      %v717 = vpop.f32.mrf.mxu0
      %v718 = vadd.f32 %v662, %v717
      %719 = vmatmul.f32.gmra.mxu0 %v625
      %v720 = vpop.f32.mrf.mxu0
      %v721 = vadd.f32 %v662, %v720
      %722 = vmatmul.f32.gmra.mxu0 %v626
      %v723 = vpop.f32.mrf.mxu0
      %v724 = vadd.f32 %v662, %v723
      %725 = vmatmul.f32.gmra.mxu0 %v627
      %v726 = vpop.f32.mrf.mxu0
      %v727 = vadd.f32 %v662, %v726
      %728 = vmatmul.f32.gmra.mxu0 %v628
      %v729 = vpop.f32.mrf.mxu0
      %v730 = vadd.f32 %v662, %v729
      %731 = vmatmul.f32.gmra.mxu0 %v629
      %v732 = vpop.f32.mrf.mxu0
      %v733 = vadd.f32 %v662, %v732
      %734 = vmatmul.f32.gmra.mxu0 %v630
      %v735 = vpop.f32.mrf.mxu0
      %v736 = vadd.f32 %v662, %v735
      %737 = vmatmul.f32.gmra.mxu0 %v631
      %v738 = vpop.f32.mrf.mxu0
      %v739 = vadd.f32 %v662, %v738
      %740 = vmatmul.f32.gmra.mxu0 %v632
      %v741 = vpop.f32.mrf.mxu0
      %v742 = vadd.f32 %v662, %v741
      %743 = vmatmul.f32.gmra.mxu0 %v633
      %v744 = vpop.f32.mrf.mxu0
      %v745 = vadd.f32 %v662, %v744
      %746 = vmatmul.f32.gmra.mxu0 %v634
      %v747 = vpop.f32.mrf.mxu0
      %v748 = vadd.f32 %v662, %v747
      %749 = vmatmul.f32.gmra.mxu0 %v635
      %v750 = vpop.f32.mrf.mxu0
      %v751 = vadd.f32 %v662, %v750
      %752 = vmatmul.f32.gmra.mxu0 %v636
      %v753 = vpop.f32.mrf.mxu0
      %v754 = vadd.f32 %v662, %v753
      %755 = vmatmul.f32.gmra.mxu0 %v637
      %v756 = vpop.f32.mrf.mxu0
      %v757 = vadd.f32 %v662, %v756
      %758 = vmatmul.f32.gmra.mxu0 %v638
      %v759 = vpop.f32.mrf.mxu0
      %v760 = vadd.f32 %v662, %v759
      %761 = vmatmul.f32.gmra.mxu0 %v639
      %v762 = vpop.f32.mrf.mxu0
      %v763 = vadd.f32 %v662, %v762
      %764 = vmatmul.f32.gmra.mxu0 %v640
      %v765 = vpop.f32.mrf.mxu0
      %v766 = vadd.f32 %v662, %v765
      %767 = vmatmul.f32.gmra.mxu0 %v641
      %v768 = vpop.f32.mrf.mxu0
      %v769 = vadd.f32 %v662, %v768
      %770 = vmatmul.f32.gmra.mxu0 %v642
      %v771 = vpop.f32.mrf.mxu0
      %v772 = vadd.f32 %v662, %v771
      %773 = vmatmul.f32.gmra.mxu0 %v643
      %v774 = vpop.f32.mrf.mxu0
      %v775 = vadd.f32 %v662, %v774
      %776 = vdwg.mxu0
      %777 = vst [vmem:[%s280] sm:$0xff] %v682
      %778 = vst [vmem:[%s280 + $0x8] sm:$0xff] %v685
      %779 = vst [vmem:[%s280 + $0x10] sm:$0xff] %v688
      %780 = vst [vmem:[%s280 + $0x18] sm:$0xff] %v691
      %781 = vst [vmem:[%s280 + $0x20] sm:$0xff] %v694
      %782 = vst [vmem:[%s280 + $0x28] sm:$0xff] %v697
      %783 = vst [vmem:[%s280 + $0x30] sm:$0xff] %v700
      %784 = vst [vmem:[%s280 + $0x38] sm:$0xff] %v703
      %785 = vst [vmem:[%s280 + $0x40] sm:$0xff] %v706
      %786 = vst [vmem:[%s280 + $0x48] sm:$0xff] %v709
      %787 = vst [vmem:[%s280 + $0x50] sm:$0xff] %v712
      %788 = vst [vmem:[%s280 + $0x58] sm:$0xff] %v715
      %789 = vst [vmem:[%s280 + $0x60] sm:$0xff] %v718
      %790 = vst [vmem:[%s280 + $0x68] sm:$0xff] %v721
      %791 = vst [vmem:[%s280 + $0x70] sm:$0xff] %v724
      %792 = vst [vmem:[%s280 + $0x78] sm:$0xff] %v727
      %793 = vst [vmem:[%s280 + $0x80] sm:$0xff] %v730
      %794 = vst [vmem:[%s280 + $0x88] sm:$0xff] %v733
      %795 = vst [vmem:[%s280 + $0x90] sm:$0xff] %v736
      %796 = vst [vmem:[%s280 + $0x98] sm:$0xff] %v739
      %797 = vst [vmem:[%s280 + $0xa0] sm:$0xff] %v742
      %798 = vst [vmem:[%s280 + $0xa8] sm:$0xff] %v745
      %799 = vst [vmem:[%s280 + $0xb0] sm:$0xff] %v748
      %800 = vst [vmem:[%s280 + $0xb8] sm:$0xff] %v751
      %801 = vst [vmem:[%s280 + $0xc0] sm:$0xff] %v754
      %802 = vst [vmem:[%s280 + $0xc8] sm:$0xff] %v757
      %803 = vst [vmem:[%s280 + $0xd0] sm:$0xff] %v760
      %804 = vst [vmem:[%s280 + $0xd8] sm:$0xff] %v763
      %805 = vst [vmem:[%s280 + $0xe0] sm:$0xff] %v766
      %806 = vst [vmem:[%s280 + $0xe8] sm:$0xff] %v769
      %807 = vst [vmem:[%s280 + $0xf0] sm:$0xff] %v772
      %808 = vst [vmem:[%s280 + $0xf8] sm:$0xff] %v775
      %s809 = smul.u32 32, %s18
      %p810 = scmp.lt.s32.totalorder %s809, 63
      %s811 = scalar_select %p810, %s809, 63
      %s812 = smul.addr %s811, 8
      %s813 = scalar_lea.vmem %s7, %s812
      // Predicated region
      $region49: #{mlp_forward.1} parent=47 // pred_check
        %p814 = pneg %p188
      $region50: #{mlp_forward.1} parent=47 // pred_check_branch
        %816 = sbr.rel (%p814) target = $region52
      $region51: #{mlp_forward.1} parent=47 // pred_region
        %s817 = smul.u32 32, %s18
      $region52: #{mlp_forward.1} parent=47 // pred_fallthru
        _
    $region48: #{mlp_forward.1} parent=5 // pred_fallthru
      _
    %p818 = scmp.le.s32.totalorder 2, %s13
    // Predicated region
    $region53: #{mlp_forward.1} parent=5 // pred_check
      %p819 = pneg %p818
    $region54: #{mlp_forward.1} parent=5 // pred_check_branch
      %821 = sbr.rel (%p819) target = $region56
    $region55: #{mlp_forward.1} parent=5 // pred_region
      %s822 = ssub.s32 %s13, 2
      // Predicated region
      $region57: #{mlp_forward.1} parent=55 // pred_check
        %p823 = pneg %p194
      $region58: #{mlp_forward.1} parent=55 // pred_check_branch
        %825 = sbr.rel (%p823) target = $region60
      $region59: #{mlp_forward.1} parent=55 // pred_region
        %s826 = smul.u32 32, %s19
        %p827 = scmp.lt.s32.totalorder %s826, 63
        %s828 = scalar_select %p827, %s826, 63
        %s829 = smul.addr %s828, 8
        %s830 = scalar_lea.vmem %s7, %s829
      $region60: #{mlp_forward.1} parent=55 // pred_fallthru
        _
    $region56: #{mlp_forward.1} parent=5 // pred_fallthru
      _
  $region6: #{mlp_forward.1} parent=0 // loop_footer
    %s17 = sadd.s32 1, %s13
  $region7: #{mlp_forward.1} parent=0 // loop_footer_branch
    %12 = sbr.rel target = $region3
  $region8: #{mlp_forward.1} parent=0 // loop_exit
    _

</llo_original>
